<compile_context>
chip_gen: v5e
topology: v5e:2x2
jax: 0.10.0
libtpu: 0.0.40
codegen_flags: <defaults>
</compile_context>

<pallas_src>
import jax
import jax.numpy as jnp
from jax.experimental import pallas as pl
from jax.experimental.pallas import tpu as pltpu

IN_DIM = 12    # 8 obs + 4 action
HID = 64
OUT_DIM = 9    # 8 next-obs + 1 reward


def _round_up(n, m):
    return ((n + m - 1) // m) * m


def mlp_kernel(x_ref, w1_ref, b1_ref, w2_ref, b2_ref, w3_ref, b3_ref, o_ref):
    # All-f32 to match the PyTorch module; this kernel is bound by the
    # lane-sparse [*,12] / [*,9] HBM streams, not the MXU.
    x = x_ref[...]                                                    # [TB, 12]

    # Layer 1: Linear(12 -> 64) + ReLU
    h1 = jnp.dot(x, w1_ref[...], preferred_element_type=jnp.float32)
    h1 = jnp.maximum(h1 + b1_ref[...], 0.0)                          # [TB, 64]

    # Layer 2: Linear(64 -> 64) + ReLU
    h2 = jnp.dot(h1, w2_ref[...], preferred_element_type=jnp.float32)
    h2 = jnp.maximum(h2 + b2_ref[...], 0.0)                          # [TB, 64]

    # Layer 3: Linear(64 -> 9), no activation
    out = jnp.dot(h2, w3_ref[...], preferred_element_type=jnp.float32)
    o_ref[...] = (out + b3_ref[...]).astype(o_ref.dtype)             # [TB, 9]


def _resident(a):
    """Full-array block, constant index_map -> DMA'd once, stays VMEM-resident."""
    zeros = (0,) * a.ndim
    return pl.BlockSpec(a.shape, lambda i, _z=zeros: _z)


def _batch_dim_semantics(core_parallel):
    if core_parallel is None:
        try:
            core_parallel = int(getattr(jax.devices()[0], "num_cores", 1)) > 1
        except Exception:
            core_parallel = False
    return (pltpu.CORE_PARALLEL,) if core_parallel else ("parallel",)


def lunar_lander_world_model(x, params, *, block_b=4096,
                             out_dtype=jnp.float32, core_parallel=None):
    """x: [B, 12] f32 -> [B, 9] (out_dtype). One fused 3-layer MLP kernel."""
    w1, b1, w2, b2, w3, b3 = params
    B = x.shape[0]

    # Batch tile: sublane-aligned (8 rows for f32), capped at block_b.
    # No wrapper-side pad: Pallas masks the ragged final block itself (OOB
    # input rows produce garbage rows whose output is never stored), so x
    # makes exactly one trip through HBM.
    tb = min(_round_up(block_b, 8), _round_up(B, 8))
    grid = (pl.cdiv(B, tb),)

    return pl.pallas_call(
        mlp_kernel,
        out_shape=jax.ShapeDtypeStruct((B, OUT_DIM), out_dtype),
        grid=grid,
        in_specs=[
            pl.BlockSpec((tb, IN_DIM), lambda i: (i, 0)),   # x: tiled over batch
            _resident(w1), _resident(b1),
            _resident(w2), _resident(b2),
            _resident(w3), _resident(b3),
        ],
        out_specs=pl.BlockSpec((tb, OUT_DIM), lambda i: (i, 0)),
        compiler_params=pltpu.CompilerParams(
            dimension_semantics=_batch_dim_semantics(core_parallel),
            vmem_limit_bytes=32 * 1024 * 1024),
    )(x, w1, b1, w2, b2, w3, b3)


def init_params(key):
    """Deterministic init mimicking nn.Linear default (U[-1/sqrt(fan_in), +])."""
    def linear(k, fan_in, fan_out):
        kw, kb = jax.random.split(k)
        bound = 1.0 / jnp.sqrt(fan_in)
        w = jax.random.uniform(kw, (fan_in, fan_out), jnp.float32, -bound, bound)
        b = jax.random.uniform(kb, (1, fan_out), jnp.float32, -bound, bound)
        return w, b

    k1, k2, k3 = jax.random.split(key, 3)
    w1, b1 = linear(k1, IN_DIM, HID)
    w2, b2 = linear(k2, HID, HID)
    w3, b3 = linear(k3, HID, OUT_DIM)
    return w1, b1, w2, b2, w3, b3


def reference(x, params):
    """Plain-XLA f32 reference (highest-precision dots)."""
    w1, b1, w2, b2, w3, b3 = params
    p = jax.lax.Precision.HIGHEST
    h1 = jnp.maximum(jnp.dot(x, w1, precision=p) + b1, 0.0)
    h2 = jnp.maximum(jnp.dot(h1, w2, precision=p) + b2, 0.0)
    return jnp.dot(h2, w3, precision=p) + b3


if __name__ == "__main__":
    key = jax.random.PRNGKey(0)
    kp, kx1, kx2 = jax.random.split(key, 3)

    params = init_params(kp)

    # Small, module-consistent shape: batch of 8 transitions, 8 obs + 4 action.
    batch = 8
    x = jax.random.normal(kx1, (batch, IN_DIM), jnp.float32)
    out = jax.block_until_ready(lunar_lander_world_model(x, params))
    ref = reference(x, params)
    assert out.shape == (batch, OUT_DIM), out.shape
    assert jnp.allclose(out, ref, atol=1e-3, rtol=1e-3), "mismatch vs reference (B=8)"

    # Ragged-batch / grid path: B=50 with a 16-row tile -> 4 steps, masked tail.
    batch2 = 50
    x2 = jax.random.normal(kx2, (batch2, IN_DIM), jnp.float32)
    out2 = jax.block_until_ready(
        lunar_lander_world_model(x2, params, block_b=16))
    ref2 = reference(x2, params)
    assert out2.shape == (batch2, OUT_DIM), out2.shape
    assert jnp.allclose(out2, ref2, atol=1e-3, rtol=1e-3), "mismatch vs reference (B=50)"

    print("KERNEL_OK")
</pallas_src>

<mosaic_0001>
module attributes {stable_mosaic.version = 11 : i64} {
  func.func @mlp_kernel(%arg0: i32, %arg1: memref<8x12xf32, #tpu.memory_space<vmem>>, %arg2: memref<12x64xf32, #tpu.memory_space<vmem>>, %arg3: memref<1x64xf32, #tpu.memory_space<vmem>>, %arg4: memref<64x64xf32, #tpu.memory_space<vmem>>, %arg5: memref<1x64xf32, #tpu.memory_space<vmem>>, %arg6: memref<64x9xf32, #tpu.memory_space<vmem>>, %arg7: memref<1x9xf32, #tpu.memory_space<vmem>>, %arg8: memref<8x9xf32, #tpu.memory_space<vmem>>) attributes {dimension_semantics = [#tpu.dimension_semantics<parallel>], iteration_bounds = array<i64: 1>, scalar_prefetch = 0 : i64, scratch_operands = 0 : i64, tpu.core_type = #tpu.core_type<tc>, window_params = [{transform_indices = @transform_0, window_bounds = array<i64: 8, 12>}, {pipeline_mode = #tpu.pipeline_mode<synchronous>, transform_indices = @transform_1, window_bounds = array<i64: 12, 64>}, {pipeline_mode = #tpu.pipeline_mode<synchronous>, transform_indices = @transform_2, window_bounds = array<i64: 1, 64>}, {pipeline_mode = #tpu.pipeline_mode<synchronous>, transform_indices = @transform_3, window_bounds = array<i64: 64, 64>}, {pipeline_mode = #tpu.pipeline_mode<synchronous>, transform_indices = @transform_4, window_bounds = array<i64: 1, 64>}, {pipeline_mode = #tpu.pipeline_mode<synchronous>, transform_indices = @transform_5, window_bounds = array<i64: 64, 9>}, {pipeline_mode = #tpu.pipeline_mode<synchronous>, transform_indices = @transform_6, window_bounds = array<i64: 1, 9>}, {transform_indices = @transform_7, window_bounds = array<i64: 8, 9>}]} {
    %c0 = arith.constant 0 : index
    %c0_0 = arith.constant 0 : index
    %0 = vector.load %arg1[%c0, %c0_0] : memref<8x12xf32, #tpu.memory_space<vmem>>, vector<8x12xf32>
    %c0_1 = arith.constant 0 : index
    %c0_2 = arith.constant 0 : index
    %1 = vector.load %arg2[%c0_1, %c0_2] : memref<12x64xf32, #tpu.memory_space<vmem>>, vector<12x64xf32>
    %cst = arith.constant dense<0.000000e+00> : vector<8x64xf32>
    %2 = tpu.matmul %0, %1, %cst {dimension_numbers = #tpu.dot_dimension_numbers<[1], [0], [0], [1], [0, 0, 1, 1], [], []>} : vector<8x12xf32>, vector<12x64xf32>, vector<8x64xf32> -> vector<8x64xf32>
    %c0_3 = arith.constant 0 : index
    %c0_4 = arith.constant 0 : index
    %3 = vector.load %arg3[%c0_3, %c0_4] : memref<1x64xf32, #tpu.memory_space<vmem>>, vector<1x64xf32>
    %4 = vector.broadcast %3 : vector<1x64xf32> to vector<8x64xf32>
    %5 = arith.addf %2, %4 : vector<8x64xf32>
    %cst_5 = arith.constant 0.000000e+00 : f32
    %6 = vector.broadcast %cst_5 : f32 to vector<8x64xf32>
    %7 = arith.maximumf %5, %6 : vector<8x64xf32>
    %c0_6 = arith.constant 0 : index
    %c0_7 = arith.constant 0 : index
    %8 = vector.load %arg4[%c0_6, %c0_7] : memref<64x64xf32, #tpu.memory_space<vmem>>, vector<64x64xf32>
    %cst_8 = arith.constant dense<0.000000e+00> : vector<8x64xf32>
    %9 = tpu.matmul %7, %8, %cst_8 {dimension_numbers = #tpu.dot_dimension_numbers<[1], [0], [0], [1], [0, 0, 1, 1], [], []>} : vector<8x64xf32>, vector<64x64xf32>, vector<8x64xf32> -> vector<8x64xf32>
    %c0_9 = arith.constant 0 : index
    %c0_10 = arith.constant 0 : index
    %10 = vector.load %arg5[%c0_9, %c0_10] : memref<1x64xf32, #tpu.memory_space<vmem>>, vector<1x64xf32>
    %11 = vector.broadcast %10 : vector<1x64xf32> to vector<8x64xf32>
    %12 = arith.addf %9, %11 : vector<8x64xf32>
    %cst_11 = arith.constant 0.000000e+00 : f32
    %13 = vector.broadcast %cst_11 : f32 to vector<8x64xf32>
    %14 = arith.maximumf %12, %13 : vector<8x64xf32>
    %c0_12 = arith.constant 0 : index
    %c0_13 = arith.constant 0 : index
    %15 = vector.load %arg6[%c0_12, %c0_13] : memref<64x9xf32, #tpu.memory_space<vmem>>, vector<64x9xf32>
    %cst_14 = arith.constant dense<0.000000e+00> : vector<8x9xf32>
    %16 = tpu.matmul %14, %15, %cst_14 {dimension_numbers = #tpu.dot_dimension_numbers<[1], [0], [0], [1], [0, 0, 1, 1], [], []>} : vector<8x64xf32>, vector<64x9xf32>, vector<8x9xf32> -> vector<8x9xf32>
    %c0_15 = arith.constant 0 : index
    %c0_16 = arith.constant 0 : index
    %17 = vector.load %arg7[%c0_15, %c0_16] : memref<1x9xf32, #tpu.memory_space<vmem>>, vector<1x9xf32>
    %18 = vector.broadcast %17 : vector<1x9xf32> to vector<8x9xf32>
    %19 = arith.addf %16, %18 : vector<8x9xf32>
    %c0_17 = arith.constant 0 : index
    %c0_18 = arith.constant 0 : index
    %20 = vector.load %arg8[%c0_17, %c0_18] : memref<8x9xf32, #tpu.memory_space<vmem>>, vector<8x9xf32>
    tpu.vector_store %arg8[%c0_17, %c0_18], %19 {strides = array<i32>} : memref<8x9xf32, #tpu.memory_space<vmem>>, vector<8x9xf32>,
    return
  }
  func.func @transform_0(%arg0: i32) -> (i32, i32) {
    %c0_i32 = arith.constant 0 : i32
    %c0_i32_0 = arith.constant 0 : i32
    return %arg0, %c0_i32 : i32, i32
  }
  func.func @transform_1(%arg0: i32) -> (i32, i32) {
    %c0_i32 = arith.constant 0 : i32
    %c0_i32_0 = arith.constant 0 : i32
    %c0_i32_1 = arith.constant 0 : i32
    return %c0_i32, %c0_i32_0 : i32, i32
  }
  func.func @transform_2(%arg0: i32) -> (i32, i32) {
    %c0_i32 = arith.constant 0 : i32
    %c0_i32_0 = arith.constant 0 : i32
    %c0_i32_1 = arith.constant 0 : i32
    return %c0_i32, %c0_i32_0 : i32, i32
  }
  func.func @transform_3(%arg0: i32) -> (i32, i32) {
    %c0_i32 = arith.constant 0 : i32
    %c0_i32_0 = arith.constant 0 : i32
    %c0_i32_1 = arith.constant 0 : i32
    return %c0_i32, %c0_i32_0 : i32, i32
  }
  func.func @transform_4(%arg0: i32) -> (i32, i32) {
    %c0_i32 = arith.constant 0 : i32
    %c0_i32_0 = arith.constant 0 : i32
    %c0_i32_1 = arith.constant 0 : i32
    return %c0_i32, %c0_i32_0 : i32, i32
  }
  func.func @transform_5(%arg0: i32) -> (i32, i32) {
    %c0_i32 = arith.constant 0 : i32
    %c0_i32_0 = arith.constant 0 : i32
    %c0_i32_1 = arith.constant 0 : i32
    return %c0_i32, %c0_i32_0 : i32, i32
  }
  func.func @transform_6(%arg0: i32) -> (i32, i32) {
    %c0_i32 = arith.constant 0 : i32
    %c0_i32_0 = arith.constant 0 : i32
    %c0_i32_1 = arith.constant 0 : i32
    return %c0_i32, %c0_i32_0 : i32, i32
  }
  func.func @transform_7(%arg0: i32) -> (i32, i32) {
    %c0_i32 = arith.constant 0 : i32
    %c0_i32_0 = arith.constant 0 : i32
    return %arg0, %c0_i32 : i32, i32
  }
}

</mosaic_0001>

<llo_original>
// kernel: tpu_custom_call.1
$region0: #{tpu_custom_call.1}
  #allocation0 [shape = 'u32[]', space=smem, size = 0x4, offset = 0x4, fixed_abs, tag = 'smem constant byte address 0x4 - core index']
  #allocation1 [shape = 'u32[72,128]{1,0:T(1,128)}', space=vmem, size = 0x9000, scoped, tag = 'internal scratch']
  %s0 = inlined_call_operand.hbm [shape: f32[8,12], index: 0, kind: input, shape index: {}]
  %s1 = inlined_call_operand.vmem [shape: f32[12,64], index: 1, kind: input, shape index: {}]
  %s2 = inlined_call_operand.vmem [shape: f32[1,64], index: 2, kind: input, shape index: {}]
  %s3 = inlined_call_operand.vmem [shape: f32[64,64], index: 3, kind: input, shape index: {}]
  %s4 = inlined_call_operand.vmem [shape: f32[1,64], index: 4, kind: input, shape index: {}]
  %s5 = inlined_call_operand.vmem [shape: f32[64,9], index: 5, kind: input, shape index: {}]
  %s6 = inlined_call_operand.vmem [shape: f32[1,9], index: 6, kind: input, shape index: {}]
  %s7 = inlined_call_operand.hbm [shape: f32[8,9], index: 7, kind: output, shape index: {}]
  %s8 = sld [smem:[#allocation0]]
  $region42: #{tpu_custom_call.1} parent=0
    _
  %s10 = ssub.s32 1, %s8
  %s11 = scalar_select 0, %s10, %s8
  $region1: #{tpu_custom_call.1} parent=0
    #allocation2 [shape = 'u8[4096]{0}', space=vmem, size = 0x1000, scoped, tag = 'input window, operand 0, single buffered']
    #allocation3 [shape = 's32[1]{0}', space=sflag, size = 0x4, scoped, tag = 'scoped memory for tpu_custom_call.1']
    #allocation4 [shape = 's32[1]{0}', space=sflag, size = 0x4, scoped, tag = 'scoped memory for tpu_custom_call.1']
    #allocation5 [shape = 'u8[4096]{0}', space=vmem, size = 0x1000, scoped, tag = 'output window, operand 0, single buffered']
    %12 = vsyncpa [#allocation3], 0
    %13 = vsyncpa [#allocation4], 0
    // Predicated region
    $region2: #{tpu_custom_call.1} parent=1 // pred_check
      _
    $region3: #{tpu_custom_call.1} parent=1 // pred_check_branch
      %15 = sbr.rel (0) target = $region5
    $region4: #{tpu_custom_call.1} parent=1 // pred_region
      %17 = vsyncadd [#allocation3], 0
      %s19 = sshll.u32 %s0, 4
      %s20 = int_to_ptr.hbm [resolvable:$true] %s19
      %s21 = sshll.u32 [#allocation2], 4
      %s22 = int_to_ptr.vmem [resolvable:$true] %s21
      %24 = dma.hbm_to_vmem [thread:$0]  %s20, 128, %s22, [#allocation3]
    $region5: #{tpu_custom_call.1} parent=1 // pred_fallthru
      _
    // Predicated region
    $region6: #{tpu_custom_call.1} parent=1 // pred_check
      _
    $region7: #{tpu_custom_call.1} parent=1 // pred_check_branch
      %26 = sbr.rel (0) target = $region9
    $region8: #{tpu_custom_call.1} parent=1 // pred_region
      _
    $region9: #{tpu_custom_call.1} parent=1 // pred_fallthru
      _
    // Predicated region
    $region10: #{tpu_custom_call.1} parent=1 // pred_check
      _
    $region11: #{tpu_custom_call.1} parent=1 // pred_check_branch
      %28 = sbr.rel (0) target = $region13
    $region12: #{tpu_custom_call.1} parent=1 // pred_region
      _
    $region13: #{tpu_custom_call.1} parent=1 // pred_fallthru
      _
    // Predicated region
    $region14: #{tpu_custom_call.1} parent=1 // pred_check
      _
    $region15: #{tpu_custom_call.1} parent=1 // pred_check_branch
      %30 = sbr.rel (0) target = $region17
    $region16: #{tpu_custom_call.1} parent=1 // pred_region
      _
    $region17: #{tpu_custom_call.1} parent=1 // pred_fallthru
      _
    // Predicated region
    $region18: #{tpu_custom_call.1} parent=1 // pred_check
      _
    $region19: #{tpu_custom_call.1} parent=1 // pred_check_branch
      %32 = sbr.rel (0) target = $region21
    $region20: #{tpu_custom_call.1} parent=1 // pred_region
      _
    $region21: #{tpu_custom_call.1} parent=1 // pred_fallthru
      _
    // Predicated region
    $region22: #{tpu_custom_call.1} parent=1 // pred_check
      _
    $region23: #{tpu_custom_call.1} parent=1 // pred_check_branch
      %34 = sbr.rel (0) target = $region25
    $region24: #{tpu_custom_call.1} parent=1 // pred_region
      _
    $region25: #{tpu_custom_call.1} parent=1 // pred_fallthru
      _
    // Predicated region
    $region26: #{tpu_custom_call.1} parent=1 // pred_check
      _
    $region27: #{tpu_custom_call.1} parent=1 // pred_check_branch
      %36 = sbr.rel (0) target = $region29
    $region28: #{tpu_custom_call.1} parent=1 // pred_region
      _
    $region29: #{tpu_custom_call.1} parent=1 // pred_fallthru
      _
    // Predicated region
    $region30: #{tpu_custom_call.1} parent=1 // pred_check
      _
    $region31: #{tpu_custom_call.1} parent=1 // pred_check_branch
      %38 = sbr.rel (0) target = $region33
    $region32: #{tpu_custom_call.1} parent=1 // pred_region
      %40 = dma.done [#allocation3], 128
    $region33: #{tpu_custom_call.1} parent=1 // pred_fallthru
      _
    %v41 = vld [vmem:[#allocation2] sm:$0xff]
    %v42 = vld [vmem:[%s1] sm:$0xff]
    %v43 = vld [vmem:[%s1 + $0x8] sm:$0xf]
    %v44 = vld [vmem:[%s2] sm:$0x1]
    %v46 = vperm.slane %v44, 0
    %vm48 = vcmask 97280
    %v50 = vsel %vm48, %v41, 0
    %vm52 = vcmask 1043456
    %v54 = vsel %vm52, %v43, 0
    %56 = vmatpush.msra.mxu0 0.0
    %57 = vmatpush.msra.mxu0 0.0
    %58 = vmatpush.msra.mxu0 0.0
    %59 = vmatpush.msra.mxu0 0.0
    %60 = vmatpush.msra.mxu0 0.0
    %61 = vmatpush.msra.mxu0 0.0
    %62 = vmatpush.msra.mxu0 0.0
    %63 = vmatpush.msra.mxu0 0.0
    %64 = vmatpush.msra.mxu0 0.0
    %65 = vmatpush.msra.mxu0 0.0
    %66 = vmatpush.msra.mxu0 0.0
    %67 = vmatpush.msra.mxu0 0.0
    %68 = vmatpush.msra.mxu0 0.0
    %69 = vmatpush.msra.mxu0 0.0
    %70 = vmatpush.msra.mxu0 %v54
    %71 = vmatpush.msra.mxu0 %v42
    %72 = vmatmul.f32.gmra.mxu0 %v50
    %v73 = vpop.f32.mrf.mxu0
    %v74 = vadd.f32 %v46, %v73
    %75 = vdwg.mxu0
    %v76 = vmax.f32 %v74, 0.0
    %v77 = vld [vmem:[%s3] sm:$0xff]
    %v78 = vld [vmem:[%s3 + $0x8] sm:$0xff]
    %v79 = vld [vmem:[%s3 + $0x10] sm:$0xff]
    %v80 = vld [vmem:[%s3 + $0x18] sm:$0xff]
    %v81 = vld [vmem:[%s3 + $0x20] sm:$0xff]
    %v82 = vld [vmem:[%s3 + $0x28] sm:$0xff]
    %v83 = vld [vmem:[%s3 + $0x30] sm:$0xff]
    %v84 = vld [vmem:[%s3 + $0x38] sm:$0xff]
    %v85 = vld [vmem:[%s4] sm:$0x1]
    %v87 = vperm.slane %v85, 0
    %vm89 = vcmask 523264
    %v91 = vsel %vm89, %v76, 0
    %93 = vmatpush.msra.mxu0 0.0
    %94 = vmatpush.msra.mxu0 0.0
    %95 = vmatpush.msra.mxu0 0.0
    %96 = vmatpush.msra.mxu0 0.0
    %97 = vmatpush.msra.mxu0 0.0
    %98 = vmatpush.msra.mxu0 0.0
    %99 = vmatpush.msra.mxu0 0.0
    %100 = vmatpush.msra.mxu0 0.0
    %101 = vmatpush.msra.mxu0 %v84
    %102 = vmatpush.msra.mxu0 %v83
    %103 = vmatpush.msra.mxu0 %v82
    %104 = vmatpush.msra.mxu0 %v81
    %105 = vmatpush.msra.mxu0 %v80
    %106 = vmatpush.msra.mxu0 %v79
    %107 = vmatpush.msra.mxu0 %v78
    %108 = vmatpush.msra.mxu0 %v77
    %109 = vmatmul.f32.gmra.mxu0 %v91
    %v110 = vpop.f32.mrf.mxu0
    %v111 = vadd.f32 %v87, %v110
    %112 = vdwg.mxu0
    %v113 = vmax.f32 %v111, 0.0
    %v114 = vld [vmem:[%s5] sm:$0xff]
    %v115 = vld [vmem:[%s5 + $0x8] sm:$0xff]
    %v116 = vld [vmem:[%s5 + $0x10] sm:$0xff]
    %v117 = vld [vmem:[%s5 + $0x18] sm:$0xff]
    %v118 = vld [vmem:[%s5 + $0x20] sm:$0xff]
    %v119 = vld [vmem:[%s5 + $0x28] sm:$0xff]
    %v120 = vld [vmem:[%s5 + $0x30] sm:$0xff]
    %v121 = vld [vmem:[%s5 + $0x38] sm:$0xff]
    %v122 = vld [vmem:[%s6] sm:$0x1]
    %v124 = vperm.slane %v122, 0
    %v127 = vsel %vm89, %v113, 0
    %129 = vmatpush.msra.mxu0 0.0
    %130 = vmatpush.msra.mxu0 0.0
    %131 = vmatpush.msra.mxu0 0.0
    %132 = vmatpush.msra.mxu0 0.0
    %133 = vmatpush.msra.mxu0 0.0
    %134 = vmatpush.msra.mxu0 0.0
    %135 = vmatpush.msra.mxu0 0.0
    %136 = vmatpush.msra.mxu0 0.0
    %137 = vmatpush.msra.mxu0 %v121
    %138 = vmatpush.msra.mxu0 %v120
    %139 = vmatpush.msra.mxu0 %v119
    %140 = vmatpush.msra.mxu0 %v118
    %141 = vmatpush.msra.mxu0 %v117
    %142 = vmatpush.msra.mxu0 %v116
    %143 = vmatpush.msra.mxu0 %v115
    %144 = vmatpush.msra.mxu0 %v114
    %145 = vmatmul.f32.gmra.mxu0 %v127
    %v146 = vpop.f32.mrf.mxu0
    %v147 = vadd.f32 %v124, %v146
    %148 = vdwg.mxu0
    %vm149 = vcmask 72704
    %150 = vst.msk [vmem:[#allocation5] sm:$0xff] %vm149, %v147
    // Predicated region
    $region34: #{tpu_custom_call.1} parent=1 // pred_check
      _
    $region35: #{tpu_custom_call.1} parent=1 // pred_check_branch
      %152 = sbr.rel (0) target = $region37
    $region36: #{tpu_custom_call.1} parent=1 // pred_region
      %154 = vsyncadd [#allocation4], 0
      %s156 = sshll.u32 [#allocation5], 4
      %s157 = int_to_ptr.vmem [resolvable:$true] %s156
      %s158 = sshll.u32 %s7, 4
      %s159 = int_to_ptr.hbm [resolvable:$true] %s158
      %161 = dma.vmem_to_hbm [thread:$0]  %s157, 128, %s159, [#allocation4]
    $region37: #{tpu_custom_call.1} parent=1 // pred_fallthru
      _
    // Predicated region
    $region38: #{tpu_custom_call.1} parent=1 // pred_check
      _
    $region39: #{tpu_custom_call.1} parent=1 // pred_check_branch
      %163 = sbr.rel (0) target = $region41
    $region40: #{tpu_custom_call.1} parent=1 // pred_region
      %165 = dma.done [#allocation4], 128
    $region41: #{tpu_custom_call.1} parent=1 // pred_fallthru
      _
    %166 = vsyncpa [#allocation3], 1
    %167 = vsyncpa [#allocation4], 1

</llo_original>
